<compile_context>
chip_gen: v6e
topology: v6e:2x2x1
jax: 0.10.0
libtpu: 0.0.40
codegen_flags: <defaults>
</compile_context>

<pallas_src>
import functools

import jax
import jax.numpy as jnp
from jax.experimental import pallas as pl
from jax.experimental.pallas import tpu as pltpu


def _round_up(a, b):
    return (a + b - 1) // b * b


def _ensemble_kernel(w_ref, x_ref, W_ref, b_ref, o_ref, acc_ref, *,
                     num_models, c_pad):
    """One (row-tile, K-tile) grid step.

    w_ref   : SMEM (M,)            scalar-prefetched normalized ensemble weights
    x_ref   : VMEM (TM, TK)        flattened input tile (compute dtype)
    W_ref   : VMEM (TK, M*C_pad)   fused classifier weight tile (compute dtype)
    b_ref   : VMEM (1, M*C_pad)    fused biases (f32, pad classes = -1e30)
    o_ref   : VMEM (TM, C_pad)     output log-probabilities (lane-dense, padded)
    acc_ref : VMEM (TM, M*C_pad)   f32 logits accumulator across K tiles
    """
    k = pl.program_id(1)

    @pl.when(k == 0)
    def _():
        acc_ref[...] = jnp.zeros_like(acc_ref)

    # MXU: accumulate partial logits for all M models at once.
    acc_ref[...] += jnp.dot(x_ref[...], W_ref[...],
                            preferred_element_type=jnp.float32)

    @pl.when(k == pl.num_programs(1) - 1)
    def _():
        logits_all = acc_ref[...] + b_ref[...]          # f32 bias add
        n_rows = logits_all.shape[0]
        mixed = jnp.zeros((n_rows, c_pad), jnp.float32)
        # M is tiny and static -> unrolled loop over lane-aligned 128-wide slices.
        for j in range(num_models):
            lg = logits_all[:, j * c_pad:(j + 1) * c_pad]
            m = jnp.max(lg, axis=-1, keepdims=True)
            e = jnp.exp(lg - m)                         # pad lanes: exp(-1e30)=0
            denom = jnp.sum(e, axis=-1, keepdims=True)
            # exact reciprocal; ensemble weight folded in (saves one VPU mul).
            inv = w_ref[j] * pl.reciprocal(denom, approx=False)
            mixed = mixed + e * inv
        o_ref[...] = jnp.log(mixed + 1e-7).astype(o_ref.dtype)


def prepare_ensemble_params(Ws, bs, model_weights, *, compute_dtype=jnp.float32):
    """One-time (hoisted) weight fusion: (M, D, C) -> (D_pad, M*C_pad).

    Column j*C_pad + c of W_fused is model j, class c; pad classes get zero
    weights and a -1e30 bias so softmax assigns them exactly zero probability.
    """
    M, D, C = Ws.shape
    C_pad = _round_up(C, 128)
    D_pad = _round_up(D, 128)

    w_norm = (model_weights / jnp.sum(model_weights)).astype(jnp.float32)

    W_p = jnp.zeros((M, D_pad, C_pad), jnp.float32)
    W_p = W_p.at[:, :D, :C].set(Ws.astype(jnp.float32))
    W_fused = jnp.transpose(W_p, (1, 0, 2)).reshape(D_pad, M * C_pad)
    W_fused = W_fused.astype(compute_dtype)

    b_p = jnp.full((M, C_pad), -1e30, jnp.float32)      # finite, not -inf
    b_p = b_p.at[:, :C].set(bs.astype(jnp.float32))
    b_fused = b_p.reshape(1, M * C_pad)

    return {
        "W_fused": W_fused,
        "b_fused": b_fused,
        "w_norm": w_norm,
        "dims": (M, C, C_pad, D, D_pad),
    }


def ensemble_forward(x_nchw, params, *, tm=256, tk=512):
    """x_nchw: (N, C_in, H, W); params from prepare_ensemble_params()."""
    W_fused = params["W_fused"]
    b_fused = params["b_fused"]
    w_norm = params["w_norm"]
    M, C, C_pad, D, D_pad = params["dims"]
    MC_pad = M * C_pad

    N = x_nchw.shape[0]
    x_flat = x_nchw.reshape(N, -1)
    assert x_flat.shape[1] == D, "input feature dim mismatch"

    # Row tile: tm (multiple of 128 ideally; 256 for v6e/v7x, 128 on v5e) at
    # production N, shrink to a sublane-aligned tile for small N.
    TM = tm if N >= tm else max(8, _round_up(N, 8))
    N_pad = _round_up(N, TM)

    # Reduction tile: largest of {tk, 256, 128} that divides D_pad.
    TK = 128
    for cand in (tk, 256, 128):
        if cand <= D_pad and D_pad % cand == 0:
            TK = cand
            break

    compute_dtype = W_fused.dtype
    x_cast = x_flat.astype(compute_dtype)
    if N_pad != N or D_pad != D:
        x_pad = jnp.zeros((N_pad, D_pad), compute_dtype).at[:N, :D].set(x_cast)
    else:
        x_pad = x_cast

    grid = (N_pad // TM, D_pad // TK)
    itemsize = jnp.dtype(compute_dtype).itemsize

    # VMEM footprint of this tiling (double-buffered inputs + scratch + output).
    vmem_est = (2 * TM * TK * itemsize          # x tiles
                + 2 * TK * MC_pad * itemsize    # W tiles
                + 2 * MC_pad * 4                # bias
                + TM * MC_pad * 4               # accumulator scratch
                + 2 * TM * C_pad * 4)           # output
    vmem_limit = int(min(64 * 1024 * 1024,
                         max(32 * 1024 * 1024, 2 * vmem_est + (2 << 20))))

    kernel = functools.partial(_ensemble_kernel, num_models=M, c_pad=C_pad)

    cost = pl.CostEstimate(
        flops=2 * N_pad * D_pad * MC_pad,
        transcendentals=N_pad * MC_pad + N_pad * C_pad,   # exp + log
        bytes_accessed=(N_pad * D_pad * itemsize
                        + D_pad * MC_pad * itemsize
                        + 4 * (MC_pad + N_pad * C_pad)),
    )

    out = pl.pallas_call(
        kernel,
        out_shape=jax.ShapeDtypeStruct((N_pad, C_pad), jnp.float32),
        grid_spec=pltpu.PrefetchScalarGridSpec(
            num_scalar_prefetch=1,                        # w_norm -> SMEM
            grid=grid,                                    # (rows, D reduction)
            in_specs=[
                # x stream; bump to pipeline_mode=pl.Buffered(3) if the DMA is
                # still exposed at production shapes and VMEM headroom allows.
                pl.BlockSpec((TM, TK), lambda i, k, w: (i, k)),
                pl.BlockSpec((TK, MC_pad), lambda i, k, w: (k, 0)),
                pl.BlockSpec((1, MC_pad), lambda i, k, w: (0, 0)),
            ],
            out_specs=pl.BlockSpec((TM, C_pad), lambda i, k, w: (i, 0)),
            scratch_shapes=[pltpu.VMEM((TM, MC_pad), jnp.float32)],
        ),
        compiler_params=pltpu.CompilerParams(
            dimension_semantics=("parallel", "arbitrary"),
            vmem_limit_bytes=vmem_limit,
        ),
        cost_estimate=cost,
    )(w_norm, x_pad, W_fused, b_fused)

    return out[:N, :C]


def _reference(x_nchw, Ws, bs, model_weights):
    """Pure-JAX reference mirroring the PyTorch forward."""
    N = x_nchw.shape[0]
    M, D, C = Ws.shape
    x_flat = x_nchw.reshape(N, D).astype(jnp.float32)
    w = model_weights / jnp.sum(model_weights)
    acc = jnp.zeros((N, C), jnp.float32)
    for i in range(M):
        logits = x_flat @ Ws[i] + bs[i]
        acc = acc + w[i] * jax.nn.softmax(logits, axis=1)
    return jnp.log(acc + 1e-7)


if __name__ == "__main__":
    key = jax.random.PRNGKey(0)
    k_x, k_w, k_b, k_mw = jax.random.split(key, 4)

    # small shapes consistent with an image classifier ensemble
    N, C_in, H, W_sp = 2, 4, 16, 16        # input images, NCHW
    M = 3                                  # number of ensemble members
    D = C_in * H * W_sp                    # flattened feature dim = 1024
    C_cls = 16                             # number of classes

    x = jax.random.normal(k_x, (N, C_in, H, W_sp), dtype=jnp.float32)
    Ws = 0.02 * jax.random.normal(k_w, (M, D, C_cls), dtype=jnp.float32)
    bs = 0.01 * jax.random.normal(k_b, (M, C_cls), dtype=jnp.float32)
    model_weights = jnp.array([1.0, 2.0, 3.0], dtype=jnp.float32)  # un-normalized

    ref = _reference(x, Ws, bs, model_weights)

    # f32 matmul path: strict check against the PyTorch-equivalent reference.
    params_f32 = prepare_ensemble_params(Ws, bs, model_weights,
                                         compute_dtype=jnp.float32)
    out_f32 = jax.block_until_ready(ensemble_forward(x, params_f32))
    assert out_f32.shape == (N, C_cls)
    assert jnp.allclose(out_f32, ref, atol=1e-5, rtol=1e-5), "f32 mismatch"

    # bf16 matmul path (MXU-native on v6e/v7x, halves W DMA bytes): looser
    # tolerance because the final log amplifies bf16 relative error.
    params_bf16 = prepare_ensemble_params(Ws, bs, model_weights,
                                          compute_dtype=jnp.bfloat16)
    out_bf16 = jax.block_until_ready(ensemble_forward(x, params_bf16))
    assert out_bf16.shape == (N, C_cls)
    assert jnp.allclose(out_bf16, ref, atol=5e-2, rtol=5e-2), "bf16 mismatch"

    print("KERNEL_OK")
</pallas_src>

<mosaic_0001>
module attributes {stable_mosaic.version = 11 : i64} {
  func.func @_ensemble_kernel(%arg0: i32, %arg1: i32, %arg2: memref<3xf32, #tpu.memory_space<smem>>, %arg3: memref<8x512xf32, #tpu.memory_space<vmem>>, %arg4: memref<512x384xf32, #tpu.memory_space<vmem>>, %arg5: memref<1x384xf32, #tpu.memory_space<vmem>>, %arg6: memref<8x128xf32, #tpu.memory_space<vmem>>, %arg7: memref<8x384xf32, #tpu.memory_space<vmem>>) attributes {dimension_semantics = [#tpu.dimension_semantics<parallel>, #tpu.dimension_semantics<arbitrary>], iteration_bounds = array<i64: 1, 2>, scalar_prefetch = 1 : i64, scratch_operands = 1 : i64, tpu.core_type = #tpu.core_type<tc>, window_params = [{transform_indices = @transform_0, window_bounds = array<i64: 8, 512>}, {transform_indices = @transform_1, window_bounds = array<i64: 512, 384>}, {pipeline_mode = #tpu.pipeline_mode<synchronous>, transform_indices = @transform_2, window_bounds = array<i64: 1, 384>}, {transform_indices = @transform_3, window_bounds = array<i64: 8, 128>}]} {
    %c0_i32 = arith.constant 0 : i32
    %0 = arith.cmpi eq, %arg1, %c0_i32 : i32
    %1 = arith.extui %0 : i1 to i32
    %c0_i32_0 = arith.constant 0 : i32
    %2 = arith.cmpi ne, %1, %c0_i32_0 : i32
    scf.if %2 {
      %cst_9 = arith.constant 0.000000e+00 : f32
      %12 = vector.broadcast %cst_9 : f32 to vector<8x384xf32>
      %c0_10 = arith.constant 0 : index
      %c0_11 = arith.constant 0 : index
      %13 = vector.load %arg7[%c0_10, %c0_11] : memref<8x384xf32, #tpu.memory_space<vmem>>, vector<8x384xf32>
      tpu.vector_store %arg7[%c0_10, %c0_11], %12 {strides = array<i32>} : memref<8x384xf32, #tpu.memory_space<vmem>>, vector<8x384xf32>,
    } else {
    }
    %c0 = arith.constant 0 : index
    %c0_1 = arith.constant 0 : index
    %3 = vector.load %arg7[%c0, %c0_1] : memref<8x384xf32, #tpu.memory_space<vmem>>, vector<8x384xf32>
    %c0_2 = arith.constant 0 : index
    %c0_3 = arith.constant 0 : index
    %4 = vector.load %arg3[%c0_2, %c0_3] : memref<8x512xf32, #tpu.memory_space<vmem>>, vector<8x512xf32>
    %c0_4 = arith.constant 0 : index
    %c0_5 = arith.constant 0 : index
    %5 = vector.load %arg4[%c0_4, %c0_5] : memref<512x384xf32, #tpu.memory_space<vmem>>, vector<512x384xf32>
    %cst = arith.constant dense<0.000000e+00> : vector<8x384xf32>
    %6 = tpu.matmul %4, %5, %cst {dimension_numbers = #tpu.dot_dimension_numbers<[1], [0], [0], [1], [0, 0, 1, 1], [], []>} : vector<8x512xf32>, vector<512x384xf32>, vector<8x384xf32> -> vector<8x384xf32>
    %7 = arith.addf %3, %6 : vector<8x384xf32>
    %c0_6 = arith.constant 0 : index
    %c0_7 = arith.constant 0 : index
    %8 = vector.load %arg7[%c0_6, %c0_7] : memref<8x384xf32, #tpu.memory_space<vmem>>, vector<8x384xf32>
    tpu.vector_store %arg7[%c0_6, %c0_7], %7 {strides = array<i32>} : memref<8x384xf32, #tpu.memory_space<vmem>>, vector<8x384xf32>,
    %c1_i32 = arith.constant 1 : i32
    %9 = arith.cmpi eq, %arg1, %c1_i32 : i32
    %10 = arith.extui %9 : i1 to i32
    %c0_i32_8 = arith.constant 0 : i32
    %11 = arith.cmpi ne, %10, %c0_i32_8 : i32
    scf.if %11 {
      %c0_9 = arith.constant 0 : index
      %c0_10 = arith.constant 0 : index
      %12 = vector.load %arg7[%c0_9, %c0_10] : memref<8x384xf32, #tpu.memory_space<vmem>>, vector<8x384xf32>
      %c0_11 = arith.constant 0 : index
      %c0_12 = arith.constant 0 : index
      %13 = vector.load %arg5[%c0_11, %c0_12] : memref<1x384xf32, #tpu.memory_space<vmem>>, vector<1x384xf32>
      %14 = vector.broadcast %13 : vector<1x384xf32> to vector<8x384xf32>
      %15 = arith.addf %12, %14 : vector<8x384xf32>
      %cst_13 = arith.constant 0.000000e+00 : f32
      %16 = vector.broadcast %cst_13 : f32 to vector<8x128xf32>
      %17 = vector.extract_strided_slice %15 {offsets = [0, 0], sizes = [8, 128], strides = [1, 1]} : vector<8x384xf32> to vector<8x128xf32>
      %cst_14 = arith.constant dense<0xFF800000> : vector<8xf32>
      %18 = vector.multi_reduction <maximumf>, %17, %cst_14 [1] : vector<8x128xf32> to vector<8xf32>
      %19 = vector.shape_cast %18 : vector<8xf32> to vector<8x1xf32>
      %20 = vector.broadcast %19 : vector<8x1xf32> to vector<8x128xf32>
      %21 = arith.subf %17, %20 : vector<8x128xf32>
      %22 = math.exp %21 : vector<8x128xf32>
      %cst_15 = arith.constant dense<0.000000e+00> : vector<8xf32>
      %23 = vector.multi_reduction <add>, %22, %cst_15 [1] : vector<8x128xf32> to vector<8xf32>
      %24 = vector.shape_cast %23 : vector<8xf32> to vector<8x1xf32>
      %c0_16 = arith.constant 0 : index
      %25 = memref.load %arg2[%c0_16] : memref<3xf32, #tpu.memory_space<smem>>
      %26 = tpu.reciprocal %24 : vector<8x1xf32> -> vector<8x1xf32>
      %27 = vector.broadcast %25 : f32 to vector<8x1xf32>
      %28 = arith.mulf %27, %26 : vector<8x1xf32>
      %29 = vector.broadcast %28 : vector<8x1xf32> to vector<8x128xf32>
      %30 = arith.mulf %22, %29 : vector<8x128xf32>
      %31 = arith.addf %16, %30 : vector<8x128xf32>
      %32 = vector.extract_strided_slice %15 {offsets = [0, 128], sizes = [8, 128], strides = [1, 1]} : vector<8x384xf32> to vector<8x128xf32>
      %cst_17 = arith.constant dense<0xFF800000> : vector<8xf32>
      %33 = vector.multi_reduction <maximumf>, %32, %cst_17 [1] : vector<8x128xf32> to vector<8xf32>
      %34 = vector.shape_cast %33 : vector<8xf32> to vector<8x1xf32>
      %35 = vector.broadcast %34 : vector<8x1xf32> to vector<8x128xf32>
      %36 = arith.subf %32, %35 : vector<8x128xf32>
      %37 = math.exp %36 : vector<8x128xf32>
      %cst_18 = arith.constant dense<0.000000e+00> : vector<8xf32>
      %38 = vector.multi_reduction <add>, %37, %cst_18 [1] : vector<8x128xf32> to vector<8xf32>
      %39 = vector.shape_cast %38 : vector<8xf32> to vector<8x1xf32>
      %c1 = arith.constant 1 : index
      %40 = memref.load %arg2[%c1] : memref<3xf32, #tpu.memory_space<smem>>
      %41 = tpu.reciprocal %39 : vector<8x1xf32> -> vector<8x1xf32>
      %42 = vector.broadcast %40 : f32 to vector<8x1xf32>
      %43 = arith.mulf %42, %41 : vector<8x1xf32>
      %44 = vector.broadcast %43 : vector<8x1xf32> to vector<8x128xf32>
      %45 = arith.mulf %37, %44 : vector<8x128xf32>
      %46 = arith.addf %31, %45 : vector<8x128xf32>
      %47 = vector.extract_strided_slice %15 {offsets = [0, 256], sizes = [8, 128], strides = [1, 1]} : vector<8x384xf32> to vector<8x128xf32>
      %cst_19 = arith.constant dense<0xFF800000> : vector<8xf32>
      %48 = vector.multi_reduction <maximumf>, %47, %cst_19 [1] : vector<8x128xf32> to vector<8xf32>
      %49 = vector.shape_cast %48 : vector<8xf32> to vector<8x1xf32>
      %50 = vector.broadcast %49 : vector<8x1xf32> to vector<8x128xf32>
      %51 = arith.subf %47, %50 : vector<8x128xf32>
      %52 = math.exp %51 : vector<8x128xf32>
      %cst_20 = arith.constant dense<0.000000e+00> : vector<8xf32>
      %53 = vector.multi_reduction <add>, %52, %cst_20 [1] : vector<8x128xf32> to vector<8xf32>
      %54 = vector.shape_cast %53 : vector<8xf32> to vector<8x1xf32>
      %c2 = arith.constant 2 : index
      %55 = memref.load %arg2[%c2] : memref<3xf32, #tpu.memory_space<smem>>
      %56 = tpu.reciprocal %54 : vector<8x1xf32> -> vector<8x1xf32>
      %57 = vector.broadcast %55 : f32 to vector<8x1xf32>
      %58 = arith.mulf %57, %56 : vector<8x1xf32>
      %59 = vector.broadcast %58 : vector<8x1xf32> to vector<8x128xf32>
      %60 = arith.mulf %52, %59 : vector<8x128xf32>
      %61 = arith.addf %46, %60 : vector<8x128xf32>
      %cst_21 = arith.constant 1.000000e-07 : f32
      %62 = vector.broadcast %cst_21 : f32 to vector<8x128xf32>
      %63 = arith.addf %61, %62 : vector<8x128xf32>
      %64 = math.log %63 : vector<8x128xf32>
      %c0_22 = arith.constant 0 : index
      %c0_23 = arith.constant 0 : index
      %65 = vector.load %arg6[%c0_22, %c0_23] : memref<8x128xf32, #tpu.memory_space<vmem>>, vector<8x128xf32>
      tpu.vector_store %arg6[%c0_22, %c0_23], %64 {strides = array<i32>} : memref<8x128xf32, #tpu.memory_space<vmem>>, vector<8x128xf32>,
    } else {
    }
    return
  }
  func.func @transform_0(%arg0: i32, %arg1: i32, %arg2: memref<3xf32, #tpu.memory_space<smem>>) -> (i32, i32) {
    %c0_i32 = arith.constant 0 : i32
    return %arg0, %arg1 : i32, i32
  }
  func.func @transform_1(%arg0: i32, %arg1: i32, %arg2: memref<3xf32, #tpu.memory_space<smem>>) -> (i32, i32) {
    %c0_i32 = arith.constant 0 : i32
    %c0_i32_0 = arith.constant 0 : i32
    return %arg1, %c0_i32 : i32, i32
  }
  func.func @transform_2(%arg0: i32, %arg1: i32, %arg2: memref<3xf32, #tpu.memory_space<smem>>) -> (i32, i32) {
    %c0_i32 = arith.constant 0 : i32
    %c0_i32_0 = arith.constant 0 : i32
    %c0_i32_1 = arith.constant 0 : i32
    return %c0_i32, %c0_i32_0 : i32, i32
  }
  func.func @transform_3(%arg0: i32, %arg1: i32, %arg2: memref<3xf32, #tpu.memory_space<smem>>) -> (i32, i32) {
    %c0_i32 = arith.constant 0 : i32
    %c0_i32_0 = arith.constant 0 : i32
    return %arg0, %c0_i32 : i32, i32
  }
}

</mosaic_0001>

<llo_original>
// kernel: tpu_custom_call.1
$region0: #{tpu_custom_call.1}
  #allocation0 [shape = 'u32[]', space=smem, size = 0x4, offset = 0x4, fixed_abs, tag = 'smem constant byte address 0x4 - core index']
  #allocation1 [shape = 'u32[144,128]{1,0:T(1,128)}', space=vmem, size = 0x12000, scoped, tag = 'internal scratch']
  #allocation2 [shape = 'f32[8,384]{1,0:T(8,128)}', space=vmem, size = 0x3000, scoped, tag = 'scratch operand']
  #allocation3 [shape = 's32[1]{0}', space=sflag, size = 0x4, scoped, tag = 'scoped memory for tpu_custom_call.1']
  #allocation4 [shape = 'u8[512]{0}', space=smem, size = 0x200, scoped, tag = 'prefetched SMEM operand 0']
  %s0 = inlined_call_operand.hbm [shape: f32[3], index: 0, kind: input, shape index: {}]
  %s1 = inlined_call_operand.hbm [shape: f32[8,1024], index: 1, kind: input, shape index: {}]
  %s2 = inlined_call_operand.hbm [shape: f32[1024,384], index: 2, kind: input, shape index: {}]
  %s3 = inlined_call_operand.hbm [shape: f32[1,384], index: 3, kind: input, shape index: {}]
  %s4 = inlined_call_operand.hbm [shape: f32[8,128], index: 4, kind: output, shape index: {}]
  %s5 = sld [smem:[#allocation0]]
  $region65: #{tpu_custom_call.1} parent=0
    _
  %s7 = ssub.s32 1, %s5
  %s8 = scalar_select 0, %s7, %s5
  %10 = dma.hbm_to_smem %s0, 16, [#allocation4], [#allocation3]
  %11 = dma.done [#allocation3], 16
  %12 = sfence
  $region1: #{tpu_custom_call.1} parent=0
    #allocation5 [shape = 'u8[32768]{0}', space=vmem, size = 0x8000, scoped, tag = 'input window, operand 1']
    #allocation6 [shape = 's32[2]{0}', space=sflag, size = 0x8, scoped, tag = 'scoped memory for tpu_custom_call.1']
    #allocation7 [shape = 's32[2]{0}', space=sflag, size = 0x8, scoped, tag = 'scoped memory for tpu_custom_call.1']
    #allocation8 [shape = 'u8[1572864]{0}', space=vmem, size = 0x180000, scoped, tag = 'input window, operand 2']
    #allocation9 [shape = 's32[2]{0}', space=sflag, size = 0x8, scoped, tag = 'scoped memory for tpu_custom_call.1']
    #allocation10 [shape = 'u8[1536]{0}', space=vmem, size = 0x800, scoped, tag = 'input window, operand 3, single buffered']
    #allocation11 [shape = 'u8[4096]{0}', space=vmem, size = 0x1000, scoped, tag = 'output window, operand 0, single buffered']
    %13 = vsyncpa [#allocation6], 0
    %s14 = scalar_lea.sflag [#allocation6], 1
    %15 = vsyncpa %s14, 0
    %16 = vsyncpa [#allocation9], 0
    %s17 = scalar_lea.sflag [#allocation9], 1
    %18 = vsyncpa %s17, 0
    %19 = vsyncpa [#allocation7], 0
    loop: start=0, step=1, limit=4
    $region2: #{tpu_custom_call.1} parent=1 // loop_pre_header
      _
    $region3: #{tpu_custom_call.1} parent=1 // loop_header
      %s21 = sphi 0, %s25
      %p22 = scmp.ge.s32.totalorder %s21, 4
      %s28 = sphi 0, %s40
      %s29 = sphi 0, %s36
      %s30 = sphi 0, %s28
      %s31 = sphi 0, %s29
      %s32 = sphi 0, %s30
      %s33 = sphi 0, %s31
      %s45 = sphi 0, %s47
      %s48 = sphi 0, %s45
      %s49 = sphi 0, %s48
      %s65 = sphi 0, %s49
      %s71 = sphi 0, %s73
      %s74 = sphi 0, %s71
      %s75 = sphi 0, %s74
      %s91 = sphi 0, %s75
      %s95 = sphi 0, %s95
      %s97 = sphi 0, %s95
      %s98 = sphi 0, %s97
      %s112 = sphi 0, %s98
      %s118 = sphi 0, %s120
      %s121 = sphi 0, %s118
      %s122 = sphi 0, %s121
      %s138 = sphi 0, %s122
    $region4: #{tpu_custom_call.1} parent=1 // loop_header_branch
      %24 = sbr.rel (%p22) target = $region8
    $region5: #{tpu_custom_call.1} parent=1 // loop_body
      %s26 = ssub.s32 %s21, 1
      %s27 = ssub.s32 %s21, 2
      %s34 = sadd.s32 1, %s29
      %p35 = scmp.ge.s32.totalorder %s34, 2
      %s36 = scalar_select %p35, 0, %s34
      %s37 = sadd.s32 1, %s28
      %s38 = scalar_select %p35, %s37, %s28
      %p39 = scmp.ge.s32.totalorder %s38, 1
      %s40 = scalar_select %p39, 0, %s38
      %s41 = ssub.s32 %s28, %s40
      %s42 = ssub.s32 %s29, %s36
      %s43 = sor.u32 %s41, %s42
      %p44 = scmp.eq.s32.totalorder %s43, 0
      %s46 = sadd.s32 %s45, 1
      %s47 = scalar_select %p44, %s45, %s46
      %p50 = pneg %p44
      %p51 = scmp.eq.s32.totalorder %s21, 1
      %p52 = por %p50, %p51
      %p53 = scmp.ne.s32.totalorder %s45, %s48
      %p54 = scmp.eq.s32.totalorder %s21, 0
      %p55 = por %p53, %p54
      %p56 = scmp.ne.s32.totalorder %s45, %s48
      %p57 = scmp.eq.s32.totalorder %s26, 1
      %p58 = por %p56, %p57
      %p59 = scmp.ne.s32.totalorder %s48, %s49
      %p60 = scmp.eq.s32.totalorder %s26, 0
      %p61 = por %p59, %p60
      %p62 = scmp.ne.s32.totalorder %s48, %s49
      %p63 = scmp.eq.s32.totalorder %s27, 1
      %p64 = por %p62, %p63
      %p66 = scmp.ne.s32.totalorder %s49, %s65
      %p67 = scmp.eq.s32.totalorder %s27, 0
      %p68 = por %p66, %p67
      %s69 = ssub.s32 %s29, %s36
      %p70 = scmp.eq.s32.totalorder %s69, 0
      %s72 = sadd.s32 %s71, 1
      %s73 = scalar_select %p70, %s71, %s72
      %p76 = pneg %p70
      %p77 = scmp.eq.s32.totalorder %s21, 1
      %p78 = por %p76, %p77
      %p79 = scmp.ne.s32.totalorder %s71, %s74
      %p80 = scmp.eq.s32.totalorder %s21, 0
      %p81 = por %p79, %p80
      %p82 = scmp.ne.s32.totalorder %s71, %s74
      %p83 = scmp.eq.s32.totalorder %s26, 1
      %p84 = por %p82, %p83
      %p85 = scmp.ne.s32.totalorder %s74, %s75
      %p86 = scmp.eq.s32.totalorder %s26, 0
      %p87 = por %p85, %p86
      %p88 = scmp.ne.s32.totalorder %s74, %s75
      %p89 = scmp.eq.s32.totalorder %s27, 1
      %p90 = por %p88, %p89
      %p92 = scmp.ne.s32.totalorder %s75, %s91
      %p93 = scmp.eq.s32.totalorder %s27, 0
      %p94 = por %p92, %p93
      %s96 = sadd.s32 %s95, 1
      %p99 = scmp.eq.s32.totalorder %s21, 1
      %p100 = scmp.ne.s32.totalorder %s95, %s97
      %p101 = scmp.eq.s32.totalorder %s21, 0
      %p102 = por %p100, %p101
      %p103 = scmp.ne.s32.totalorder %s95, %s97
      %p104 = scmp.eq.s32.totalorder %s26, 1
      %p105 = por %p103, %p104
      %p106 = scmp.ne.s32.totalorder %s97, %s98
      %p107 = scmp.eq.s32.totalorder %s26, 0
      %p108 = por %p106, %p107
      %p109 = scmp.ne.s32.totalorder %s97, %s98
      %p110 = scmp.eq.s32.totalorder %s27, 1
      %p111 = por %p109, %p110
      %p113 = scmp.ne.s32.totalorder %s98, %s112
      %p114 = scmp.eq.s32.totalorder %s27, 0
      %p115 = por %p113, %p114
      %s116 = ssub.s32 %s28, %s40
      %p117 = scmp.eq.s32.totalorder %s116, 0
      %s119 = sadd.s32 %s118, 1
      %s120 = scalar_select %p117, %s118, %s119
      %p123 = pneg %p117
      %p124 = scmp.eq.s32.totalorder %s21, 1
      %p125 = por %p123, %p124
      %p126 = scmp.ne.s32.totalorder %s118, %s121
      %p127 = scmp.eq.s32.totalorder %s21, 0
      %p128 = por %p126, %p127
      %p129 = scmp.ne.s32.totalorder %s118, %s121
      %p130 = scmp.eq.s32.totalorder %s26, 1
      %p131 = por %p129, %p130
      %p132 = scmp.ne.s32.totalorder %s121, %s122
      %p133 = scmp.eq.s32.totalorder %s26, 0
      %p134 = por %p132, %p133
      %p135 = scmp.ne.s32.totalorder %s121, %s122
      %p136 = scmp.eq.s32.totalorder %s27, 1
      %p137 = por %p135, %p136
      %p139 = scmp.ne.s32.totalorder %s122, %s138
      %p140 = scmp.eq.s32.totalorder %s27, 0
      %p141 = por %p139, %p140
      %p142 = scmp.le.s32.totalorder 1, %s21
      %p143 = scmp.lt.s32.totalorder %s21, 3
      %p144 = pnand %p142, %p143
      %p145 = pneg %p144
      // Predicated region
      $region9: #{tpu_custom_call.1} parent=5 // pred_check
        _
      $region10: #{tpu_custom_call.1} parent=5 // pred_check_branch
        %147 = sbr.rel (%p144) target = $region12
      $region11: #{tpu_custom_call.1} parent=5 // pred_region
        %s148 = ssub.s32 %s21, 1
        // Predicated region
        $region13: #{tpu_custom_call.1} parent=11 // pred_check
          %p149 = pneg %p108
        $region14: #{tpu_custom_call.1} parent=11 // pred_check_branch
          %151 = sbr.rel (%p149) target = $region16
        $region15: #{tpu_custom_call.1} parent=11 // pred_region
          %s153 = ssub.s32 48, 48
          %154 = vsyncadd [#allocation9], %s153
          %s156 = sshll.u32 [#allocation10], 4
          %s157 = int_to_ptr.vmem [resolvable:$true] %s156
          %159 = dma.hbm_to_vmem [thread:$0]  %s3, 48, %s157, [#allocation9]
        $region16: #{tpu_custom_call.1} parent=11 // pred_fallthru
          _
      $region12: #{tpu_custom_call.1} parent=5 // pred_fallthru
        _
      %p160 = scmp.lt.s32.totalorder %s21, 2
      // Predicated region
      $region17: #{tpu_custom_call.1} parent=5 // pred_check
        %p161 = pneg %p160
      $region18: #{tpu_custom_call.1} parent=5 // pred_check_branch
        %163 = sbr.rel (%p161) target = $region20
      $region19: #{tpu_custom_call.1} parent=5 // pred_region
        // Predicated region
        $region21: #{tpu_custom_call.1} parent=19 // pred_check
          %p164 = pneg %p55
        $region22: #{tpu_custom_call.1} parent=19 // pred_check_branch
          %166 = sbr.rel (%p164) target = $region24
        $region23: #{tpu_custom_call.1} parent=19 // pred_region
          %s167 = sand.u32 %s45, 1
          %s168 = scalar_lea.sflag [#allocation6], %s167
          %s169 = sand.u32 %s45, 1
          %s170 = smul.addr %s169, 32
          %s171 = scalar_lea.vmem [#allocation5], %s170
          %s172 = smul.u32 4, %s29
          %s174 = ssub.s32 512, 512
          %175 = vsyncadd %s168, %s174
          %s176 = smul.addr %s28, 8
          %s177 = sadd.s32 %s172, %s176
          %s178 = smul.addr %s177, 128
          %s179 = scalar_lea.hbm %s1, %s178
          %s181 = sshll.u32 %s171, 4
          %s182 = int_to_ptr.vmem [resolvable:$true] %s181
          %184 = dma.hbm_to_vmem [thread:$0]  %s179, 512, %s182, %s168
        $region24: #{tpu_custom_call.1} parent=19 // pred_fallthru
          _
        // Predicated region
        $region25: #{tpu_custom_call.1} parent=19 // pred_check
          %p185 = pneg %p81
        $region26: #{tpu_custom_call.1} parent=19 // pred_check_branch
          %187 = sbr.rel (%p185) target = $region28
        $region27: #{tpu_custom_call.1} parent=19 // pred_region
          %s188 = sand.u32 %s21, 1
          %s189 = scalar_lea.sflag [#allocation9], %s188
          %s190 = sand.u32 %s71, 1
          %s191 = smul.addr %s190, 1536
          %s192 = scalar_lea.vmem [#allocation8], %s191
          %s193 = smul.u32 64, %s29
          %s195 = ssub.s32 24576, 24576
          %196 = vsyncadd %s189, %s195
          %s197 = smul.addr %s193, 3
          %s198 = smul.addr %s197, 128
          %s199 = scalar_lea.hbm %s2, %s198
          %s200 = sshll.u32 %s192, 4
          %s201 = int_to_ptr.vmem [resolvable:$true] %s200
          %206 = dma.hbm_to_vmem [thread:$0]  %s199, 24576, %s201, %s189, 384, 384, 24
        $region28: #{tpu_custom_call.1} parent=19 // pred_fallthru
          _
      $region20: #{tpu_custom_call.1} parent=5 // pred_fallthru
        _
      %p207 = scmp.le.s32.totalorder 1, %s21
      %p208 = scmp.lt.s32.totalorder %s21, 3
      %p209 = pnand %p207, %p208
      %p210 = pneg %p209
      // Predicated region
      $region29: #{tpu_custom_call.1} parent=5 // pred_check
        _
      $region30: #{tpu_custom_call.1} parent=5 // pred_check_branch
        %212 = sbr.rel (%p209) target = $region32
      $region31: #{tpu_custom_call.1} parent=5 // pred_region
        %s213 = ssub.s32 %s21, 1
        %s214 = sand.u32 %s48, 1
        %s215 = scalar_lea.sflag [#allocation6], %s214
        %s216 = sand.u32 %s48, 1
        %s217 = smul.addr %s216, 32
        %s218 = scalar_lea.vmem [#allocation5], %s217
        // Predicated region
        $region33: #{tpu_custom_call.1} parent=31 // pred_check
          %p219 = pneg %p61
        $region34: #{tpu_custom_call.1} parent=31 // pred_check_branch
          %221 = sbr.rel (%p219) target = $region36
        $region35: #{tpu_custom_call.1} parent=31 // pred_region
          %222 = dma.done %s215, 512
        $region36: #{tpu_custom_call.1} parent=31 // pred_fallthru
          _
        %s223 = sand.u32 %s26, 1
        %s224 = scalar_lea.sflag [#allocation9], %s223
        %s225 = sand.u32 %s74, 1
        %s226 = smul.addr %s225, 1536
        %s227 = scalar_lea.vmem [#allocation8], %s226
        // Predicated region
        $region37: #{tpu_custom_call.1} parent=31 // pred_check
          %p228 = pneg %p87
        $region38: #{tpu_custom_call.1} parent=31 // pred_check_branch
          %230 = sbr.rel (%p228) target = $region40
        $region39: #{tpu_custom_call.1} parent=31 // pred_region
          %231 = dma.done %s224, 24576
        $region40: #{tpu_custom_call.1} parent=31 // pred_fallthru
          _
        // Predicated region
        $region41: #{tpu_custom_call.1} parent=31 // pred_check
          %p232 = pneg %p108
        $region42: #{tpu_custom_call.1} parent=31 // pred_check_branch
          %234 = sbr.rel (%p232) target = $region44
        $region43: #{tpu_custom_call.1} parent=31 // pred_region
          %235 = dma.done [#allocation9], 48
        $region44: #{tpu_custom_call.1} parent=31 // pred_fallthru
          _
        %s236 = sand.u32 %s48, 1
        %s237 = scalar_lea.sflag [#allocation6], %s236
        %s238 = sand.u32 %s48, 1
        %s239 = smul.addr %s238, 32
        %s240 = scalar_lea.vmem [#allocation5], %s239
        %p241 = pneg %p61
        %p242 = pneg %p58
        %s243 = sand.u32 %s26, 1
        %s244 = scalar_lea.sflag [#allocation9], %s243
        %s245 = sand.u32 %s74, 1
        %s246 = smul.addr %s245, 1536
        %s247 = scalar_lea.vmem [#allocation8], %s246
        %p248 = pneg %p87
        %p249 = pneg %p84
        %p250 = pneg %p108
        %p251 = pneg %p105
        %p252 = pneg %p134
        %p253 = pneg %p131
        %s254 = smul.u32 4, %s31
        %s255 = smul.u32 64, %s31
        %p256 = scmp.eq.s32.totalorder %s31, 0
        // Predicated region
        $region45: #{tpu_custom_call.1} parent=31 // pred_check
          %p257 = pneg %p256
        $region46: #{tpu_custom_call.1} parent=31 // pred_check_branch
          %259 = sbr.rel (%p257) target = $region48
        $region47: #{tpu_custom_call.1} parent=31 // pred_region
          %260 = vst [vmem:[#allocation2] sm:$0xff] 0.0
          %261 = vst [vmem:[#allocation2 + $0x8] sm:$0xff] 0.0
          %262 = vst [vmem:[#allocation2 + $0x10] sm:$0xff] 0.0
        $region48: #{tpu_custom_call.1} parent=31 // pred_fallthru
          _
        %v263 = vld [vmem:[#allocation2] sm:$0xff]
        %v264 = vld [vmem:[#allocation2 + $0x8] sm:$0xff]
        %v265 = vld [vmem:[#allocation2 + $0x10] sm:$0xff]
        %v266 = vld [vmem:[%s218] sm:$0xff]
        %v267 = vld [vmem:[%s218 + $0x8] sm:$0xff]
        %v268 = vld [vmem:[%s218 + $0x10] sm:$0xff]
        %v269 = vld [vmem:[%s218 + $0x18] sm:$0xff]
        %v270 = vld [vmem:[%s227] sm:$0xff]
        %v271 = vld [vmem:[%s227 + $0x8] sm:$0xff]
        %v272 = vld [vmem:[%s227 + $0x10] sm:$0xff]
        %v273 = vld [vmem:[%s227 + $0x18] sm:$0xff]
        %v274 = vld [vmem:[%s227 + $0x20] sm:$0xff]
        %v275 = vld [vmem:[%s227 + $0x28] sm:$0xff]
        %v276 = vld [vmem:[%s227 + $0x30] sm:$0xff]
        %v277 = vld [vmem:[%s227 + $0x38] sm:$0xff]
        %v278 = vld [vmem:[%s227 + $0x40] sm:$0xff]
        %v279 = vld [vmem:[%s227 + $0x48] sm:$0xff]
        %v280 = vld [vmem:[%s227 + $0x50] sm:$0xff]
        %v281 = vld [vmem:[%s227 + $0x58] sm:$0xff]
        %v282 = vld [vmem:[%s227 + $0x60] sm:$0xff]
        %v283 = vld [vmem:[%s227 + $0x68] sm:$0xff]
        %v284 = vld [vmem:[%s227 + $0x70] sm:$0xff]
        %v285 = vld [vmem:[%s227 + $0x78] sm:$0xff]
        %v286 = vld [vmem:[%s227 + $0x80] sm:$0xff]
        %v287 = vld [vmem:[%s227 + $0x88] sm:$0xff]
        %v288 = vld [vmem:[%s227 + $0x90] sm:$0xff]
        %v289 = vld [vmem:[%s227 + $0x98] sm:$0xff]
        %v290 = vld [vmem:[%s227 + $0xa0] sm:$0xff]
        %v291 = vld [vmem:[%s227 + $0xa8] sm:$0xff]
        %v292 = vld [vmem:[%s227 + $0xb0] sm:$0xff]
        %v293 = vld [vmem:[%s227 + $0xb8] sm:$0xff]
        %v294 = vld [vmem:[%s227 + $0xc0] sm:$0xff]
        %v295 = vld [vmem:[%s227 + $0xc8] sm:$0xff]
        %v296 = vld [vmem:[%s227 + $0xd0] sm:$0xff]
        %v297 = vld [vmem:[%s227 + $0xd8] sm:$0xff]
        %v298 = vld [vmem:[%s227 + $0xe0] sm:$0xff]
        %v299 = vld [vmem:[%s227 + $0xe8] sm:$0xff]
        %v300 = vld [vmem:[%s227 + $0xf0] sm:$0xff]
        %v301 = vld [vmem:[%s227 + $0xf8] sm:$0xff]
        %v302 = vld [vmem:[%s227 + $0x100] sm:$0xff]
        %v303 = vld [vmem:[%s227 + $0x108] sm:$0xff]
        %v304 = vld [vmem:[%s227 + $0x110] sm:$0xff]
        %v305 = vld [vmem:[%s227 + $0x118] sm:$0xff]
        %v306 = vld [vmem:[%s227 + $0x120] sm:$0xff]
        %v307 = vld [vmem:[%s227 + $0x128] sm:$0xff]
        %v308 = vld [vmem:[%s227 + $0x130] sm:$0xff]
        %v309 = vld [vmem:[%s227 + $0x138] sm:$0xff]
        %v310 = vld [vmem:[%s227 + $0x140] sm:$0xff]
        %v311 = vld [vmem:[%s227 + $0x148] sm:$0xff]
        %v312 = vld [vmem:[%s227 + $0x150] sm:$0xff]
        %v313 = vld [vmem:[%s227 + $0x158] sm:$0xff]
        %v314 = vld [vmem:[%s227 + $0x160] sm:$0xff]
        %v315 = vld [vmem:[%s227 + $0x168] sm:$0xff]
        %v316 = vld [vmem:[%s227 + $0x170] sm:$0xff]
        %v317 = vld [vmem:[%s227 + $0x178] sm:$0xff]
        %v318 = vld [vmem:[%s227 + $0x180] sm:$0xff]
        %v319 = vld [vmem:[%s227 + $0x188] sm:$0xff]
        %v320 = vld [vmem:[%s227 + $0x190] sm:$0xff]
        %v321 = vld [vmem:[%s227 + $0x198] sm:$0xff]
        %v322 = vld [vmem:[%s227 + $0x1a0] sm:$0xff]
        %v323 = vld [vmem:[%s227 + $0x1a8] sm:$0xff]
        %v324 = vld [vmem:[%s227 + $0x1b0] sm:$0xff]
        %v325 = vld [vmem:[%s227 + $0x1b8] sm:$0xff]
        %v326 = vld [vmem:[%s227 + $0x1c0] sm:$0xff]
        %v327 = vld [vmem:[%s227 + $0x1c8] sm:$0xff]
        %v328 = vld [vmem:[%s227 + $0x1d0] sm:$0xff]
        %v329 = vld [vmem:[%s227 + $0x1d8] sm:$0xff]
        %v330 = vld [vmem:[%s227 + $0x1e0] sm:$0xff]
        %v331 = vld [vmem:[%s227 + $0x1e8] sm:$0xff]
        %v332 = vld [vmem:[%s227 + $0x1f0] sm:$0xff]
        %v333 = vld [vmem:[%s227 + $0x1f8] sm:$0xff]
        %v334 = vld [vmem:[%s227 + $0x200] sm:$0xff]
        %v335 = vld [vmem:[%s227 + $0x208] sm:$0xff]
        %v336 = vld [vmem:[%s227 + $0x210] sm:$0xff]
        %v337 = vld [vmem:[%s227 + $0x218] sm:$0xff]
        %v338 = vld [vmem:[%s227 + $0x220] sm:$0xff]
        %v339 = vld [vmem:[%s227 + $0x228] sm:$0xff]
        %v340 = vld [vmem:[%s227 + $0x230] sm:$0xff]
        %v341 = vld [vmem:[%s227 + $0x238] sm:$0xff]
        %v342 = vld [vmem:[%s227 + $0x240] sm:$0xff]
        %v343 = vld [vmem:[%s227 + $0x248] sm:$0xff]
        %v344 = vld [vmem:[%s227 + $0x250] sm:$0xff]
        %v345 = vld [vmem:[%s227 + $0x258] sm:$0xff]
        %v346 = vld [vmem:[%s227 + $0x260] sm:$0xff]
        %v347 = vld [vmem:[%s227 + $0x268] sm:$0xff]
        %v348 = vld [vmem:[%s227 + $0x270] sm:$0xff]
        %v349 = vld [vmem:[%s227 + $0x278] sm:$0xff]
        %v350 = vld [vmem:[%s227 + $0x280] sm:$0xff]
        %v351 = vld [vmem:[%s227 + $0x288] sm:$0xff]
        %v352 = vld [vmem:[%s227 + $0x290] sm:$0xff]
        %v353 = vld [vmem:[%s227 + $0x298] sm:$0xff]
        %v354 = vld [vmem:[%s227 + $0x2a0] sm:$0xff]
        %v355 = vld [vmem:[%s227 + $0x2a8] sm:$0xff]
        %v356 = vld [vmem:[%s227 + $0x2b0] sm:$0xff]
        %v357 = vld [vmem:[%s227 + $0x2b8] sm:$0xff]
        %v358 = vld [vmem:[%s227 + $0x2c0] sm:$0xff]
        %v359 = vld [vmem:[%s227 + $0x2c8] sm:$0xff]
        %v360 = vld [vmem:[%s227 + $0x2d0] sm:$0xff]
        %v361 = vld [vmem:[%s227 + $0x2d8] sm:$0xff]
        %v362 = vld [vmem:[%s227 + $0x2e0] sm:$0xff]
        %v363 = vld [vmem:[%s227 + $0x2e8] sm:$0xff]
        %v364 = vld [vmem:[%s227 + $0x2f0] sm:$0xff]
        %v365 = vld [vmem:[%s227 + $0x2f8] sm:$0xff]
        %v366 = vld [vmem:[%s227 + $0x300] sm:$0xff]
        %v367 = vld [vmem:[%s227 + $0x308] sm:$0xff]
        %v368 = vld [vmem:[%s227 + $0x310] sm:$0xff]
        %v369 = vld [vmem:[%s227 + $0x318] sm:$0xff]
        %v370 = vld [vmem:[%s227 + $0x320] sm:$0xff]
        %v371 = vld [vmem:[%s227 + $0x328] sm:$0xff]
        %v372 = vld [vmem:[%s227 + $0x330] sm:$0xff]
        %v373 = vld [vmem:[%s227 + $0x338] sm:$0xff]
        %v374 = vld [vmem:[%s227 + $0x340] sm:$0xff]
        %v375 = vld [vmem:[%s227 + $0x348] sm:$0xff]
        %v376 = vld [vmem:[%s227 + $0x350] sm:$0xff]
        %v377 = vld [vmem:[%s227 + $0x358] sm:$0xff]
        %v378 = vld [vmem:[%s227 + $0x360] sm:$0xff]
        %v379 = vld [vmem:[%s227 + $0x368] sm:$0xff]
        %v380 = vld [vmem:[%s227 + $0x370] sm:$0xff]
        %v381 = vld [vmem:[%s227 + $0x378] sm:$0xff]
        %v382 = vld [vmem:[%s227 + $0x380] sm:$0xff]
        %v383 = vld [vmem:[%s227 + $0x388] sm:$0xff]
        %v384 = vld [vmem:[%s227 + $0x390] sm:$0xff]
        %v385 = vld [vmem:[%s227 + $0x398] sm:$0xff]
        %v386 = vld [vmem:[%s227 + $0x3a0] sm:$0xff]
        %v387 = vld [vmem:[%s227 + $0x3a8] sm:$0xff]
        %v388 = vld [vmem:[%s227 + $0x3b0] sm:$0xff]
        %v389 = vld [vmem:[%s227 + $0x3b8] sm:$0xff]
        %v390 = vld [vmem:[%s227 + $0x3c0] sm:$0xff]
        %v391 = vld [vmem:[%s227 + $0x3c8] sm:$0xff]
        %v392 = vld [vmem:[%s227 + $0x3d0] sm:$0xff]
        %v393 = vld [vmem:[%s227 + $0x3d8] sm:$0xff]
        %v394 = vld [vmem:[%s227 + $0x3e0] sm:$0xff]
        %v395 = vld [vmem:[%s227 + $0x3e8] sm:$0xff]
        %v396 = vld [vmem:[%s227 + $0x3f0] sm:$0xff]
        %v397 = vld [vmem:[%s227 + $0x3f8] sm:$0xff]
        %v398 = vld [vmem:[%s227 + $0x400] sm:$0xff]
        %v399 = vld [vmem:[%s227 + $0x408] sm:$0xff]
        %v400 = vld [vmem:[%s227 + $0x410] sm:$0xff]
        %v401 = vld [vmem:[%s227 + $0x418] sm:$0xff]
        %v402 = vld [vmem:[%s227 + $0x420] sm:$0xff]
        %v403 = vld [vmem:[%s227 + $0x428] sm:$0xff]
        %v404 = vld [vmem:[%s227 + $0x430] sm:$0xff]
        %v405 = vld [vmem:[%s227 + $0x438] sm:$0xff]
        %v406 = vld [vmem:[%s227 + $0x440] sm:$0xff]
        %v407 = vld [vmem:[%s227 + $0x448] sm:$0xff]
        %v408 = vld [vmem:[%s227 + $0x450] sm:$0xff]
        %v409 = vld [vmem:[%s227 + $0x458] sm:$0xff]
        %v410 = vld [vmem:[%s227 + $0x460] sm:$0xff]
        %v411 = vld [vmem:[%s227 + $0x468] sm:$0xff]
        %v412 = vld [vmem:[%s227 + $0x470] sm:$0xff]
        %v413 = vld [vmem:[%s227 + $0x478] sm:$0xff]
        %v414 = vld [vmem:[%s227 + $0x480] sm:$0xff]
        %v415 = vld [vmem:[%s227 + $0x488] sm:$0xff]
        %v416 = vld [vmem:[%s227 + $0x490] sm:$0xff]
        %v417 = vld [vmem:[%s227 + $0x498] sm:$0xff]
        %v418 = vld [vmem:[%s227 + $0x4a0] sm:$0xff]
        %v419 = vld [vmem:[%s227 + $0x4a8] sm:$0xff]
        %v420 = vld [vmem:[%s227 + $0x4b0] sm:$0xff]
        %v421 = vld [vmem:[%s227 + $0x4b8] sm:$0xff]
        %v422 = vld [vmem:[%s227 + $0x4c0] sm:$0xff]
        %v423 = vld [vmem:[%s227 + $0x4c8] sm:$0xff]
        %v424 = vld [vmem:[%s227 + $0x4d0] sm:$0xff]
        %v425 = vld [vmem:[%s227 + $0x4d8] sm:$0xff]
        %v426 = vld [vmem:[%s227 + $0x4e0] sm:$0xff]
        %v427 = vld [vmem:[%s227 + $0x4e8] sm:$0xff]
        %v428 = vld [vmem:[%s227 + $0x4f0] sm:$0xff]
        %v429 = vld [vmem:[%s227 + $0x4f8] sm:$0xff]
        %v430 = vld [vmem:[%s227 + $0x500] sm:$0xff]
        %v431 = vld [vmem:[%s227 + $0x508] sm:$0xff]
        %v432 = vld [vmem:[%s227 + $0x510] sm:$0xff]
        %v433 = vld [vmem:[%s227 + $0x518] sm:$0xff]
        %v434 = vld [vmem:[%s227 + $0x520] sm:$0xff]
        %v435 = vld [vmem:[%s227 + $0x528] sm:$0xff]
        %v436 = vld [vmem:[%s227 + $0x530] sm:$0xff]
        %v437 = vld [vmem:[%s227 + $0x538] sm:$0xff]
        %v438 = vld [vmem:[%s227 + $0x540] sm:$0xff]
        %v439 = vld [vmem:[%s227 + $0x548] sm:$0xff]
        %v440 = vld [vmem:[%s227 + $0x550] sm:$0xff]
        %v441 = vld [vmem:[%s227 + $0x558] sm:$0xff]
        %v442 = vld [vmem:[%s227 + $0x560] sm:$0xff]
        %v443 = vld [vmem:[%s227 + $0x568] sm:$0xff]
        %v444 = vld [vmem:[%s227 + $0x570] sm:$0xff]
        %v445 = vld [vmem:[%s227 + $0x578] sm:$0xff]
        %v446 = vld [vmem:[%s227 + $0x580] sm:$0xff]
        %v447 = vld [vmem:[%s227 + $0x588] sm:$0xff]
        %v448 = vld [vmem:[%s227 + $0x590] sm:$0xff]
        %v449 = vld [vmem:[%s227 + $0x598] sm:$0xff]
        %v450 = vld [vmem:[%s227 + $0x5a0] sm:$0xff]
        %v451 = vld [vmem:[%s227 + $0x5a8] sm:$0xff]
        %v452 = vld [vmem:[%s227 + $0x5b0] sm:$0xff]
        %v453 = vld [vmem:[%s227 + $0x5b8] sm:$0xff]
        %v454 = vld [vmem:[%s227 + $0x5c0] sm:$0xff]
        %v455 = vld [vmem:[%s227 + $0x5c8] sm:$0xff]
        %v456 = vld [vmem:[%s227 + $0x5d0] sm:$0xff]
        %v457 = vld [vmem:[%s227 + $0x5d8] sm:$0xff]
        %v458 = vld [vmem:[%s227 + $0x5e0] sm:$0xff]
        %v459 = vld [vmem:[%s227 + $0x5e8] sm:$0xff]
        %v460 = vld [vmem:[%s227 + $0x5f0] sm:$0xff]
        %v461 = vld [vmem:[%s227 + $0x5f8] sm:$0xff]
        %462 = vmatprep.subr.mxu0 %v316
        %463 = vmatpush1.msra.mxu0 %v315
        %464 = vmatprep.subr.mxu0 %v313
        %465 = vmatpush1.msra.mxu0 %v312
        %466 = vmatprep.subr.mxu0 %v310
        %467 = vmatpush1.msra.mxu0 %v309
        %468 = vmatprep.subr.mxu0 %v307
        %469 = vmatpush1.msra.mxu0 %v306
        %470 = vmatprep.subr.mxu0 %v304
        %471 = vmatpush1.msra.mxu0 %v303
        %472 = vmatprep.subr.mxu0 %v301
        %473 = vmatpush1.msra.mxu0 %v300
        %474 = vmatprep.subr.mxu0 %v298
        %475 = vmatpush1.msra.mxu0 %v297
        %476 = vmatprep.subr.mxu0 %v295
        %477 = vmatpush1.msra.mxu0 %v294
        %478 = vmatprep.subr.mxu0 %v292
        %479 = vmatpush1.msra.mxu0 %v291
        %480 = vmatprep.subr.mxu0 %v289
        %481 = vmatpush1.msra.mxu0 %v288
        %482 = vmatprep.subr.mxu0 %v286
        %483 = vmatpush1.msra.mxu0 %v285
        %484 = vmatprep.subr.mxu0 %v283
        %485 = vmatpush1.msra.mxu0 %v282
        %486 = vmatprep.subr.mxu0 %v280
        %487 = vmatpush1.msra.mxu0 %v279
        %488 = vmatprep.subr.mxu0 %v277
        %489 = vmatpush1.msra.mxu0 %v276
        %490 = vmatprep.subr.mxu0 %v274
        %491 = vmatpush1.msra.mxu0 %v273
        %492 = vmatprep.subr.mxu0 %v271
        %493 = vmatpush1.msra.mxu0 %v270
        %494 = vmatprep.subr.mxu0 %v364
        %495 = vmatpush2.msra.mxu0 %v363
        %496 = vmatprep.subr.mxu0 %v361
        %497 = vmatpush2.msra.mxu0 %v360
        %498 = vmatprep.subr.mxu0 %v358
        %499 = vmatpush2.msra.mxu0 %v357
        %500 = vmatprep.subr.mxu0 %v355
        %501 = vmatpush2.msra.mxu0 %v354
        %502 = vmatprep.subr.mxu0 %v352
        %503 = vmatpush2.msra.mxu0 %v351
        %504 = vmatprep.subr.mxu0 %v349
        %505 = vmatpush2.msra.mxu0 %v348
        %506 = vmatprep.subr.mxu0 %v346
        %507 = vmatpush2.msra.mxu0 %v345
        %508 = vmatprep.subr.mxu0 %v343
        %509 = vmatpush2.msra.mxu0 %v342
        %510 = vmatprep.subr.mxu0 %v340
        %511 = vmatpush2.msra.mxu0 %v339
        %512 = vmatprep.subr.mxu0 %v337
        %513 = vmatpush2.msra.mxu0 %v336
        %514 = vmatprep.subr.mxu0 %v334
        %515 = vmatpush2.msra.mxu0 %v333
        %516 = vmatprep.subr.mxu0 %v331
        %517 = vmatpush2.msra.mxu0 %v330
        %518 = vmatprep.subr.mxu0 %v328
        %519 = vmatpush2.msra.mxu0 %v327
        %520 = vmatprep.subr.mxu0 %v325
        %521 = vmatpush2.msra.mxu0 %v324
        %522 = vmatprep.subr.mxu0 %v322
        %523 = vmatpush2.msra.mxu0 %v321
        %524 = vmatprep.subr.mxu0 %v319
        %525 = vmatpush2.msra.mxu0 %v318
        %526 = vmatprep.mubr.f32.mxu0 %v267
        %527 = vmatmul.mubr.f32.gmra.mxu0 %v266
        %v528 = vpop.f32.mrf.mxu0
        %v529 = vadd.f32 0.0, %v528
        %v530 = vpop.f32.mrf.mxu0
        %v531 = vadd.f32 0.0, %v530
        %532 = vdwg.mxu0
        %533 = vmatprep.subr.mxu0 %v412
        %534 = vmatpush1.msra.mxu0 %v411
        %535 = vmatprep.subr.mxu0 %v409
        %536 = vmatpush1.msra.mxu0 %v408
        %537 = vmatprep.subr.mxu0 %v406
        %538 = vmatpush1.msra.mxu0 %v405
        %539 = vmatprep.subr.mxu0 %v403
        %540 = vmatpush1.msra.mxu0 %v402
        %541 = vmatprep.subr.mxu0 %v400
        %542 = vmatpush1.msra.mxu0 %v399
        %543 = vmatprep.subr.mxu0 %v397
        %544 = vmatpush1.msra.mxu0 %v396
        %545 = vmatprep.subr.mxu0 %v394
        %546 = vmatpush1.msra.mxu0 %v393
        %547 = vmatprep.subr.mxu0 %v391
        %548 = vmatpush1.msra.mxu0 %v390
        %549 = vmatprep.subr.mxu0 %v388
        %550 = vmatpush1.msra.mxu0 %v387
        %551 = vmatprep.subr.mxu0 %v385
        %552 = vmatpush1.msra.mxu0 %v384
        %553 = vmatprep.subr.mxu0 %v382
        %554 = vmatpush1.msra.mxu0 %v381
        %555 = vmatprep.subr.mxu0 %v379
        %556 = vmatpush1.msra.mxu0 %v378
        %557 = vmatprep.subr.mxu0 %v376
        %558 = vmatpush1.msra.mxu0 %v375
        %559 = vmatprep.subr.mxu0 %v373
        %560 = vmatpush1.msra.mxu0 %v372
        %561 = vmatprep.subr.mxu0 %v370
        %562 = vmatpush1.msra.mxu0 %v369
        %563 = vmatprep.subr.mxu0 %v367
        %564 = vmatpush1.msra.mxu0 %v366
        %565 = vmatprep.subr.mxu0 %v460
        %566 = vmatpush2.msra.mxu0 %v459
        %567 = vmatprep.subr.mxu0 %v457
        %568 = vmatpush2.msra.mxu0 %v456
        %569 = vmatprep.subr.mxu0 %v454
        %570 = vmatpush2.msra.mxu0 %v453
        %571 = vmatprep.subr.mxu0 %v451
        %572 = vmatpush2.msra.mxu0 %v450
        %573 = vmatprep.subr.mxu0 %v448
        %574 = vmatpush2.msra.mxu0 %v447
        %575 = vmatprep.subr.mxu0 %v445
        %576 = vmatpush2.msra.mxu0 %v444
        %577 = vmatprep.subr.mxu0 %v442
        %578 = vmatpush2.msra.mxu0 %v441
        %579 = vmatprep.subr.mxu0 %v439
        %580 = vmatpush2.msra.mxu0 %v438
        %581 = vmatprep.subr.mxu0 %v436
        %582 = vmatpush2.msra.mxu0 %v435
        %583 = vmatprep.subr.mxu0 %v433
        %584 = vmatpush2.msra.mxu0 %v432
        %585 = vmatprep.subr.mxu0 %v430
        %586 = vmatpush2.msra.mxu0 %v429
        %587 = vmatprep.subr.mxu0 %v427
        %588 = vmatpush2.msra.mxu0 %v426
        %589 = vmatprep.subr.mxu0 %v424
        %590 = vmatpush2.msra.mxu0 %v423
        %591 = vmatprep.subr.mxu0 %v421
        %592 = vmatpush2.msra.mxu0 %v420
        %593 = vmatprep.subr.mxu0 %v418
        %594 = vmatpush2.msra.mxu0 %v417
        %595 = vmatprep.subr.mxu0 %v415
        %596 = vmatpush2.msra.mxu0 %v414
        %597 = vmatprep.mubr.f32.mxu0 %v269
        %598 = vmatmul.mubr.f32.gmra.mxu0 %v268
        %v599 = vpop.f32.mrf.mxu0
        %v600 = vadd.f32 %v529, %v599
        %v601 = vpop.f32.mrf.mxu0
        %v602 = vadd.f32 %v531, %v601
        %603 = vdwg.mxu0
        %604 = vmatprep.subr.mxu0 0.0
        %605 = vmatpush1.msra.mxu0 %v317
        %606 = vmatprep.subr.mxu0 0.0
        %607 = vmatpush1.msra.mxu0 %v314
        %608 = vmatprep.subr.mxu0 0.0
        %609 = vmatpush1.msra.mxu0 %v311
        %610 = vmatprep.subr.mxu0 0.0
        %611 = vmatpush1.msra.mxu0 %v308
        %612 = vmatprep.subr.mxu0 0.0
        %613 = vmatpush1.msra.mxu0 %v305
        %614 = vmatprep.subr.mxu0 0.0
        %615 = vmatpush1.msra.mxu0 %v302
        %616 = vmatprep.subr.mxu0 0.0
        %617 = vmatpush1.msra.mxu0 %v299
        %618 = vmatprep.subr.mxu0 0.0
        %619 = vmatpush1.msra.mxu0 %v296
        %620 = vmatprep.subr.mxu0 0.0
        %621 = vmatpush1.msra.mxu0 %v293
        %622 = vmatprep.subr.mxu0 0.0
        %623 = vmatpush1.msra.mxu0 %v290
        %624 = vmatprep.subr.mxu0 0.0
        %625 = vmatpush1.msra.mxu0 %v287
        %626 = vmatprep.subr.mxu0 0.0
        %627 = vmatpush1.msra.mxu0 %v284
        %628 = vmatprep.subr.mxu0 0.0
        %629 = vmatpush1.msra.mxu0 %v281
        %630 = vmatprep.subr.mxu0 0.0
        %631 = vmatpush1.msra.mxu0 %v278
        %632 = vmatprep.subr.mxu0 0.0
        %633 = vmatpush1.msra.mxu0 %v275
        %634 = vmatprep.subr.mxu0 0.0
        %635 = vmatpush1.msra.mxu0 %v272
        %636 = vmatprep.subr.mxu0 0.0
        %637 = vmatpush2.msra.mxu0 %v365
        %638 = vmatprep.subr.mxu0 0.0
        %639 = vmatpush2.msra.mxu0 %v362
        %640 = vmatprep.subr.mxu0 0.0
        %641 = vmatpush2.msra.mxu0 %v359
        %642 = vmatprep.subr.mxu0 0.0
        %643 = vmatpush2.msra.mxu0 %v356
        %644 = vmatprep.subr.mxu0 0.0
        %645 = vmatpush2.msra.mxu0 %v353
        %646 = vmatprep.subr.mxu0 0.0
        %647 = vmatpush2.msra.mxu0 %v350
        %648 = vmatprep.subr.mxu0 0.0
        %649 = vmatpush2.msra.mxu0 %v347
        %650 = vmatprep.subr.mxu0 0.0
        %651 = vmatpush2.msra.mxu0 %v344
        %652 = vmatprep.subr.mxu0 0.0
        %653 = vmatpush2.msra.mxu0 %v341
        %654 = vmatprep.subr.mxu0 0.0
        %655 = vmatpush2.msra.mxu0 %v338
        %656 = vmatprep.subr.mxu0 0.0
        %657 = vmatpush2.msra.mxu0 %v335
        %658 = vmatprep.subr.mxu0 0.0
        %659 = vmatpush2.msra.mxu0 %v332
        %660 = vmatprep.subr.mxu0 0.0
        %661 = vmatpush2.msra.mxu0 %v329
        %662 = vmatprep.subr.mxu0 0.0
        %663 = vmatpush2.msra.mxu0 %v326
        %664 = vmatprep.subr.mxu0 0.0
        %665 = vmatpush2.msra.mxu0 %v323
        %666 = vmatprep.subr.mxu0 0.0
        %667 = vmatpush2.msra.mxu0 %v320
        %668 = vmatprep.mubr.f32.mxu0 %v267
        %669 = vmatmul.mubr.f32.gmra.mxu0 %v266
        %v670 = vpop.f32.mrf.mxu0
        %v671 = vadd.f32 0.0, %v670
        %v672 = vpop.f32.mrf.mxu0
        %673 = vdwg.mxu0
        %674 = vmatprep.subr.mxu0 0.0
        %675 = vmatpush1.msra.mxu0 %v413
        %676 = vmatprep.subr.mxu0 0.0
        %677 = vmatpush1.msra.mxu0 %v410
        %678 = vmatprep.subr.mxu0 0.0
        %679 = vmatpush1.msra.mxu0 %v407
        %680 = vmatprep.subr.mxu0 0.0
        %681 = vmatpush1.msra.mxu0 %v404
        %682 = vmatprep.subr.mxu0 0.0
        %683 = vmatpush1.msra.mxu0 %v401
        %684 = vmatprep.subr.mxu0 0.0
        %685 = vmatpush1.msra.mxu0 %v398
        %686 = vmatprep.subr.mxu0 0.0
        %687 = vmatpush1.msra.mxu0 %v395
        %688 = vmatprep.subr.mxu0 0.0
        %689 = vmatpush1.msra.mxu0 %v392
        %690 = vmatprep.subr.mxu0 0.0
        %691 = vmatpush1.msra.mxu0 %v389
        %692 = vmatprep.subr.mxu0 0.0
        %693 = vmatpush1.msra.mxu0 %v386
        %694 = vmatprep.subr.mxu0 0.0
        %695 = vmatpush1.msra.mxu0 %v383
        %696 = vmatprep.subr.mxu0 0.0
        %697 = vmatpush1.msra.mxu0 %v380
        %698 = vmatprep.subr.mxu0 0.0
        %699 = vmatpush1.msra.mxu0 %v377
        %700 = vmatprep.subr.mxu0 0.0
        %701 = vmatpush1.msra.mxu0 %v374
        %702 = vmatprep.subr.mxu0 0.0
        %703 = vmatpush1.msra.mxu0 %v371
        %704 = vmatprep.subr.mxu0 0.0
        %705 = vmatpush1.msra.mxu0 %v368
        %706 = vmatprep.subr.mxu0 0.0
        %707 = vmatpush2.msra.mxu0 %v461
        %708 = vmatprep.subr.mxu0 0.0
        %709 = vmatpush2.msra.mxu0 %v458
        %710 = vmatprep.subr.mxu0 0.0
        %711 = vmatpush2.msra.mxu0 %v455
        %712 = vmatprep.subr.mxu0 0.0
        %713 = vmatpush2.msra.mxu0 %v452
        %714 = vmatprep.subr.mxu0 0.0
        %715 = vmatpush2.msra.mxu0 %v449
        %716 = vmatprep.subr.mxu0 0.0
        %717 = vmatpush2.msra.mxu0 %v446
        %718 = vmatprep.subr.mxu0 0.0
        %719 = vmatpush2.msra.mxu0 %v443
        %720 = vmatprep.subr.mxu0 0.0
        %721 = vmatpush2.msra.mxu0 %v440
        %722 = vmatprep.subr.mxu0 0.0
        %723 = vmatpush2.msra.mxu0 %v437
        %724 = vmatprep.subr.mxu0 0.0
        %725 = vmatpush2.msra.mxu0 %v434
        %726 = vmatprep.subr.mxu0 0.0
        %727 = vmatpush2.msra.mxu0 %v431
        %728 = vmatprep.subr.mxu0 0.0
        %729 = vmatpush2.msra.mxu0 %v428
        %730 = vmatprep.subr.mxu0 0.0
        %731 = vmatpush2.msra.mxu0 %v425
        %732 = vmatprep.subr.mxu0 0.0
        %733 = vmatpush2.msra.mxu0 %v422
        %734 = vmatprep.subr.mxu0 0.0
        %735 = vmatpush2.msra.mxu0 %v419
        %736 = vmatprep.subr.mxu0 0.0
        %737 = vmatpush2.msra.mxu0 %v416
        %738 = vmatprep.mubr.f32.mxu0 %v269
        %739 = vmatmul.mubr.f32.gmra.mxu0 %v268
        %v740 = vpop.f32.mrf.mxu0
        %v741 = vadd.f32 %v671, %v740
        %v742 = vpop.f32.mrf.mxu0
        %743 = vdwg.mxu0
        %v744 = vadd.f32 %v263, %v600
        %v745 = vadd.f32 %v264, %v602
        %v746 = vadd.f32 %v265, %v741
        %747 = vst [vmem:[#allocation2] sm:$0xff] %v744
        %748 = vst [vmem:[#allocation2 + $0x8] sm:$0xff] %v745
        %749 = vst [vmem:[#allocation2 + $0x10] sm:$0xff] %v746
        %p750 = scmp.eq.s32.totalorder %s31, 1
        // Predicated region
        $region49: #{tpu_custom_call.1} parent=31 // pred_check
          %p751 = pneg %p750
        $region50: #{tpu_custom_call.1} parent=31 // pred_check_branch
          %753 = sbr.rel (%p751) target = $region52
        $region51: #{tpu_custom_call.1} parent=31 // pred_region
          %v754 = vld [vmem:[#allocation2] sm:$0xff]
          %v755 = vld [vmem:[#allocation2 + $0x8] sm:$0xff]
          %v756 = vld [vmem:[#allocation2 + $0x10] sm:$0xff]
          %v757 = vld [vmem:[#allocation10] sm:$0x7]
          %v759 = vlaneseq
          %v760 = vshrl.u32 %v759, 7
          %v761 = vsub.s32 0, %v760
          %v762 = vrot.slane %v757, %v761
          %v763 = vlaneseq
          %v764 = vshrl.u32 %v763, 7
          %v765 = vsub.s32 1, %v764
          %v766 = vrot.slane %v757, %v765
          %v767 = vlaneseq
          %v768 = vshrl.u32 %v767, 7
          %v769 = vsub.s32 2, %v768
          %v770 = vrot.slane %v757, %v769
          %v774 = vadd.f32 %v754, %v762
          %v775 = vadd.f32 %v755, %v766
          %v776 = vadd.f32 %v756, %v770
          %777 = vmax.xlane.f32.xlu0 %v774
          %v778 = vpop.xlane.xlu0 %777
          %v779 = vsub.f32 %v774, %v778
          %v780 = vmul.f32 %v779, 1.442695
          %v781 = vpow.pop %v780
          %782 = vadd.xlane.f32.xlu0 %v781
          %v783 = vpop.xlane.xlu0 %782
          %s784 = sld [smem:[#allocation4]]
          %v785 = vrcp.pop %v783
          %v786 = vstv %s784
          %v787 = vmul.f32 %v786, %v785
          %v788 = vmul.f32 %v781, %v787
          %v789 = vadd.f32 %v788, 0.0
          %790 = vmax.xlane.f32.xlu0 %v775
          %v791 = vpop.xlane.xlu0 %790
          %v792 = vsub.f32 %v775, %v791
          %v793 = vmul.f32 %v792, 1.442695
          %v794 = vpow.pop %v793
          %795 = vadd.xlane.f32.xlu0 %v794
          %v796 = vpop.xlane.xlu0 %795
          %s797 = sld [smem:[#allocation4 + $0x1]]
          %v798 = vrcp.pop %v796
          %v799 = vstv %s797
          %v800 = vmul.f32 %v799, %v798
          %v801 = vmul.f32 %v794, %v800
          %v802 = vadd.f32 %v789, %v801
          %803 = vmax.xlane.f32.xlu0 %v776
          %v804 = vpop.xlane.xlu0 %803
          %v805 = vsub.f32 %v776, %v804
          %v806 = vmul.f32 %v805, 1.442695
          %v807 = vpow.pop %v806
          %808 = vadd.xlane.f32.xlu0 %v807
          %v809 = vpop.xlane.xlu0 %808
          %s810 = sld [smem:[#allocation4 + $0x2]]
          %v811 = vrcp.pop %v809
          %v812 = vstv %s810
          %v813 = vmul.f32 %v812, %v811
          %v814 = vmul.f32 %v807, %v813
          %v815 = vadd.f32 %v802, %v814
          %v816 = vadd.f32 %v815, 1e-07
          %v817 = vlog2.pop %v816
          %v818 = vmul.f32 %v817, 0.6931472
          %819 = vst [vmem:[#allocation11] sm:$0xff] %v818
        $region52: #{tpu_custom_call.1} parent=31 // pred_fallthru
          _
        // Predicated region
        $region53: #{tpu_custom_call.1} parent=31 // pred_check
          %p820 = pneg %p131
        $region54: #{tpu_custom_call.1} parent=31 // pred_check_branch
          %822 = sbr.rel (%p820) target = $region56
        $region55: #{tpu_custom_call.1} parent=31 // pred_region
          %s824 = ssub.s32 128, 128
          %825 = vsyncadd [#allocation7], %s824
          %s826 = smul.addr %s30, 128
          %s827 = scalar_lea.hbm %s4, %s826
          %s829 = sshll.u32 [#allocation11], 4
          %s830 = int_to_ptr.vmem [resolvable:$true] %s829
          %832 = dma.vmem_to_hbm [thread:$0]  %s830, 128, %s827, [#allocation7]
        $region56: #{tpu_custom_call.1} parent=31 // pred_fallthru
          _
        // Predicated region
        $region57: #{tpu_custom_call.1} parent=31 // pred_check
          %p833 = pneg %p131
        $region58: #{tpu_custom_call.1} parent=31 // pred_check_branch
          %835 = sbr.rel (%p833) target = $region60
        $region59: #{tpu_custom_call.1} parent=31 // pred_region
          %836 = dma.done [#allocation7], 128
        $region60: #{tpu_custom_call.1} parent=31 // pred_fallthru
          _
      $region32: #{tpu_custom_call.1} parent=5 // pred_fallthru
        _
      %p837 = scmp.le.s32.totalorder 2, %s21
      // Predicated region
      $region61: #{tpu_custom_call.1} parent=5 // pred_check
        %p838 = pneg %p837
      $region62: #{tpu_custom_call.1} parent=5 // pred_check_branch
        %840 = sbr.rel (%p838) target = $region64
      $region63: #{tpu_custom_call.1} parent=5 // pred_region
        %s841 = ssub.s32 %s21, 2
      $region64: #{tpu_custom_call.1} parent=5 // pred_fallthru
        _
    $region6: #{tpu_custom_call.1} parent=1 // loop_footer
      %s25 = sadd.s32 1, %s21
    $region7: #{tpu_custom_call.1} parent=1 // loop_footer_branch
      %20 = sbr.rel target = $region3
    $region8: #{tpu_custom_call.1} parent=1 // loop_exit
      _
    %842 = vsyncpa [#allocation6], 1
    %s843 = scalar_lea.sflag [#allocation6], 1
    %844 = vsyncpa %s843, 1
    %845 = vsyncpa [#allocation9], 1
    %s846 = scalar_lea.sflag [#allocation9], 1
    %847 = vsyncpa %s846, 1
    %848 = vsyncpa [#allocation7], 1
    %s849 = scalar_lea.sflag [#allocation7], 1
    %850 = vsyncpa %s849, 1

</llo_original>
